<compile_context>
chip_gen: v7x
topology: tpu7x:2x2x1
jax: 0.10.0
libtpu: 0.0.40
codegen_flags: <defaults>
</compile_context>

<pallas_src>
import jax
import jax.numpy as jnp
from jax.experimental import pallas as pl
from jax.experimental.pallas import tpu as pltpu


def _round_up(x: int, m: int) -> int:
    return (x + m - 1) // m * m


def make_dot_selector_kernel(h2p: int, vp: int, qwp: int):
    """h2p / vp / qwp are the 128-lane-aligned fused-section widths."""

    def kernel(x_ref, wx_ref, bx_ref, wh_ref, bh_ref, out_ref):
        x = x_ref[...]                                              # (TB, H)

        # fused x-path:  [ fc1 | visibility | visibility(pair-swapped) ]
        zx = jnp.dot(x, wx_ref[...], preferred_element_type=jnp.float32)
        zx = zx + bx_ref[...]                                       # (TB, WX) f32

        # every slice boundary is a multiple of 128 -> tile-aligned, free
        h = jnp.maximum(zx[:, :h2p], 0.0)                           # fc1 + ReLU
        vis = zx[:, h2p:h2p + vp]                                   # own logits
        vis_sw = zx[:, h2p + vp:h2p + 2 * vp]                       # partner logits
        # 2-way softmax over adjacent pairs == sigmoid(own - partner) (exact);
        # EUP transcendental, no explicit divide, no inf on large gaps.
        mask = jax.nn.sigmoid(vis - vis_sw)                         # (TB, Vp)

        # fused, role_latent-folded h-path:  [ fc2 | fc2_all ]
        zh = jnp.dot(h.astype(wh_ref.dtype), wh_ref[...],
                     preferred_element_type=jnp.float32)
        zh = zh + bh_ref[...]                                       # (TB, QWp) f32

        # both stores are full-width and 128-lane aligned -> unmasked vst
        out_ref[:, :qwp] = zh
        out_ref[:, qwp:] = mask

    return kernel


def dot_selector_forward(inputs, role_latent, params, n_agents: int,
                         action_latent_dim: int, *,
                         compute_dtype=jnp.float32, tb_cap: int = 512):
    B, H = inputs.shape
    R = role_latent.shape[0]
    A = action_latent_dim
    H2 = 2 * H
    V = 2 * n_agents
    QW = R + n_agents * R                       # role_q width + role_q_all width

    # 128-lane-aligned section widths (lane-dense slices and stores)
    H2p = _round_up(H2, 128)
    Vp = _round_up(V, 128)
    QWp = _round_up(QW, 128)
    WX = H2p + 2 * Vp
    DOUT = QWp + Vp                             # multiple of 128

    w1, b1, w2, b2, w2a, b2a, wv, bv = params

    # -------- weight folding / fusion (plain XLA, f32, outside the kernel) ---
    perm = jnp.arange(V).reshape(-1, 2)[:, ::-1].reshape(-1)   # pair-swap perm

    def pad_c(m, width):                        # zero-pad columns to `width`
        return jnp.pad(m, ((0, 0), (0, width - m.shape[1])))

    # x path: [ w1 | wv | wv(pair-swapped) ], each section 128-padded,
    # pre-transposed to (in, out)
    wx = jnp.concatenate([pad_c(w1.T, H2p),
                          pad_c(wv.T, Vp),
                          pad_c(wv.T[:, perm], Vp)], axis=1)         # (H, WX)
    bx = jnp.concatenate([jnp.pad(b1, (0, H2p - H2)),
                          jnp.pad(bv, (0, Vp - V)),
                          jnp.pad(bv[perm], (0, Vp - V))])[None, :]  # (1, WX)

    # h path: fold role_latent into fc2 / fc2_all (in f32; cast last).
    # (x.detach() in fc2_all only affects gradients; forward is identical)
    w_role = w2.T @ role_latent.T                                    # (2H, R)
    b_role = b2 @ role_latent.T                                      # (R,)
    w_all = jnp.einsum('nah,ra->hnr',
                       w2a.reshape(n_agents, A, H2),
                       role_latent).reshape(H2, n_agents * R)        # (2H, nA*R)
    b_all = jnp.einsum('na,ra->nr',
                       b2a.reshape(n_agents, A),
                       role_latent).reshape(n_agents * R)
    wh = jnp.pad(jnp.concatenate([w_role, w_all], axis=1),
                 ((0, H2p - H2), (0, QWp - QW)))                     # (H2p, QWp)
    bh = jnp.pad(jnp.concatenate([b_role, b_all]), (0, QWp - QW))[None, :]

    # cast operands last (bf16 at real sizes); biases / accumulation stay f32
    x = inputs.astype(compute_dtype)
    wx = wx.astype(compute_dtype)
    wh = wh.astype(compute_dtype)
    bx = bx.astype(jnp.float32)
    bh = bh.astype(jnp.float32)

    # ---------------- batch tiling ----------------
    B8 = _round_up(B, 8)
    if B8 <= 8:
        TB = B8
    else:
        # >=2 parallel blocks once the batch exceeds one tile (v7x megacore),
        # capped for VMEM (raise tb_cap on v6e's 128 MiB, lower / bf16 on v5e)
        TB = min(tb_cap, _round_up(pl.cdiv(B8, 2), 8))
    Bp = _round_up(B, TB)
    if Bp != B:
        x = jnp.pad(x, ((0, Bp - B), (0, 0)))       # zero rows, sliced off below
    nb = Bp // TB

    # explicit VMEM budget: resident weights/biases + double-buffered x/out tiles
    itemsize = jnp.dtype(compute_dtype).itemsize
    est = (wx.size * itemsize + wh.size * itemsize + (bx.size + bh.size) * 4
           + TB * H * itemsize + TB * DOUT * 4)
    vmem_limit = int(min(56 * 2 ** 20, max(32 * 2 ** 20, 2 * est)))

    kernel = make_dot_selector_kernel(H2p, Vp, QWp)

    out = pl.pallas_call(
        kernel,
        out_shape=jax.ShapeDtypeStruct((Bp, DOUT), jnp.float32),
        grid_spec=pltpu.PrefetchScalarGridSpec(
            num_scalar_prefetch=0,
            grid=(nb,),
            in_specs=[
                pl.BlockSpec((TB, H), lambda i: (i, 0)),         # x (tiled)
                pl.BlockSpec((H, WX), lambda i: (0, 0)),         # wx (resident)
                pl.BlockSpec((1, WX), lambda i: (0, 0)),         # bx
                pl.BlockSpec((H2p, QWp), lambda i: (0, 0)),      # wh (resident)
                pl.BlockSpec((1, QWp), lambda i: (0, 0)),        # bh
            ],
            out_specs=pl.BlockSpec((TB, DOUT), lambda i: (i, 0)),
        ),
        compiler_params=pltpu.CompilerParams(
            dimension_semantics=("parallel",),
            vmem_limit_bytes=vmem_limit),
    )(x, wx, bx, wh, bh)

    # ---------- glue (matches torch .reshape / .squeeze semantics) ----------
    role_q = jnp.squeeze(out[:B, :R])
    role_q_all = jnp.squeeze(out[:B, R:QW].reshape(B * n_agents, R))
    mask = out[:B, QWp:QWp + V].reshape(-1, 2)
    return role_q, role_q_all, mask


def reference_forward(inputs, role_latent, params, n_agents, action_latent_dim):
    w1, b1, w2, b2, w2a, b2a, wv, bv = params
    B = inputs.shape[0]
    A = action_latent_dim
    h = jax.nn.relu(inputs @ w1.T + b1)
    own = h @ w2.T + b2
    role_q = own @ role_latent.T
    allz = (h @ w2a.T + b2a).reshape(B * n_agents, A)
    role_q_all = allz @ role_latent.T
    vis = (inputs @ wv.T + bv).reshape(-1, n_agents, n_agents, 2)
    mask = jax.nn.softmax(vis, axis=-1).reshape(-1, 2)
    return jnp.squeeze(role_q), jnp.squeeze(role_q_all), mask


# TODO(synk): select_role / epsilon_schedule (stochastic role picking, epsilon
# annealing state) are host-side control logic, not part of forward(); not
# implemented as kernels.

if __name__ == "__main__":
    hidden_dim = 32
    n_agents = 4
    action_latent_dim = 8
    n_roles = 3
    bs = 2
    B = bs * n_agents            # per-agent hidden states

    key = jax.random.PRNGKey(0)
    ks = jax.random.split(key, 12)

    inputs = jax.random.normal(ks[0], (B, hidden_dim), dtype=jnp.float32)
    role_latent = jax.random.normal(ks[1], (n_roles, action_latent_dim),
                                    dtype=jnp.float32)

    def lin_init(kw, kb, out_f, in_f):
        scale = 1.0 / jnp.sqrt(in_f)
        w = jax.random.uniform(kw, (out_f, in_f), jnp.float32, -scale, scale)
        b = jax.random.uniform(kb, (out_f,), jnp.float32, -scale, scale)
        return w, b

    w1, b1 = lin_init(ks[2], ks[3], 2 * hidden_dim, hidden_dim)
    w2a, b2a = lin_init(ks[4], ks[5], n_agents * action_latent_dim, 2 * hidden_dim)
    w2, b2 = lin_init(ks[6], ks[7], action_latent_dim, 2 * hidden_dim)
    wv, bv = lin_init(ks[8], ks[9], n_agents * 2, hidden_dim)

    params = (w1, b1, w2, b2, w2a, b2a, wv, bv)

    # ---- standard batch ----
    role_q, role_q_all, mask = dot_selector_forward(
        inputs, role_latent, params, n_agents, action_latent_dim)
    jax.block_until_ready((role_q, role_q_all, mask))

    r_q, r_qa, r_m = reference_forward(inputs, role_latent, params,
                                       n_agents, action_latent_dim)
    assert jnp.allclose(role_q, r_q, rtol=1e-4, atol=1e-4)
    assert jnp.allclose(role_q_all, r_qa, rtol=1e-4, atol=1e-4)
    assert jnp.allclose(mask, r_m, rtol=1e-4, atol=1e-4)

    # ---- ragged batch (B not a multiple of 8) exercises padding + 2 blocks ----
    B2 = 3 * n_agents
    inputs2 = jax.random.normal(ks[10], (B2, hidden_dim), dtype=jnp.float32)
    q2, qa2, m2 = dot_selector_forward(
        inputs2, role_latent, params, n_agents, action_latent_dim)
    jax.block_until_ready((q2, qa2, m2))
    r_q2, r_qa2, r_m2 = reference_forward(inputs2, role_latent, params,
                                          n_agents, action_latent_dim)
    assert jnp.allclose(q2, r_q2, rtol=1e-4, atol=1e-4)
    assert jnp.allclose(qa2, r_qa2, rtol=1e-4, atol=1e-4)
    assert jnp.allclose(m2, r_m2, rtol=1e-4, atol=1e-4)

    print("KERNEL_OK")
</pallas_src>

<mosaic_0001>
module attributes {stable_mosaic.version = 11 : i64} {
  func.func @kernel(%arg0: i32, %arg1: memref<8x32xf32, #tpu.memory_space<vmem>>, %arg2: memref<32x384xf32, #tpu.memory_space<vmem>>, %arg3: memref<1x384xf32, #tpu.memory_space<vmem>>, %arg4: memref<128x128xf32, #tpu.memory_space<vmem>>, %arg5: memref<1x128xf32, #tpu.memory_space<vmem>>, %arg6: memref<8x256xf32, #tpu.memory_space<vmem>>) attributes {dimension_semantics = [#tpu.dimension_semantics<parallel>], iteration_bounds = array<i64: 1>, scalar_prefetch = 0 : i64, scratch_operands = 0 : i64, tpu.core_type = #tpu.core_type<tc>, window_params = [{transform_indices = @transform_0, window_bounds = array<i64: 8, 32>}, {pipeline_mode = #tpu.pipeline_mode<synchronous>, transform_indices = @transform_1, window_bounds = array<i64: 32, 384>}, {pipeline_mode = #tpu.pipeline_mode<synchronous>, transform_indices = @transform_2, window_bounds = array<i64: 1, 384>}, {pipeline_mode = #tpu.pipeline_mode<synchronous>, transform_indices = @transform_3, window_bounds = array<i64: 128, 128>}, {pipeline_mode = #tpu.pipeline_mode<synchronous>, transform_indices = @transform_4, window_bounds = array<i64: 1, 128>}, {transform_indices = @transform_5, window_bounds = array<i64: 8, 256>}]} {
    %c0 = arith.constant 0 : index
    %c0_0 = arith.constant 0 : index
    %0 = vector.load %arg1[%c0, %c0_0] : memref<8x32xf32, #tpu.memory_space<vmem>>, vector<8x32xf32>
    %c0_1 = arith.constant 0 : index
    %c0_2 = arith.constant 0 : index
    %1 = vector.load %arg2[%c0_1, %c0_2] : memref<32x384xf32, #tpu.memory_space<vmem>>, vector<32x384xf32>
    %cst = arith.constant dense<0.000000e+00> : vector<8x384xf32>
    %2 = tpu.matmul %0, %1, %cst {dimension_numbers = #tpu.dot_dimension_numbers<[1], [0], [0], [1], [0, 0, 1, 1], [], []>} : vector<8x32xf32>, vector<32x384xf32>, vector<8x384xf32> -> vector<8x384xf32>
    %c0_3 = arith.constant 0 : index
    %c0_4 = arith.constant 0 : index
    %3 = vector.load %arg3[%c0_3, %c0_4] : memref<1x384xf32, #tpu.memory_space<vmem>>, vector<1x384xf32>
    %4 = vector.broadcast %3 : vector<1x384xf32> to vector<8x384xf32>
    %5 = arith.addf %2, %4 : vector<8x384xf32>
    %6 = vector.extract_strided_slice %5 {offsets = [0, 0], sizes = [8, 128], strides = [1, 1]} : vector<8x384xf32> to vector<8x128xf32>
    %cst_5 = arith.constant 0.000000e+00 : f32
    %7 = vector.broadcast %cst_5 : f32 to vector<8x128xf32>
    %8 = arith.maximumf %6, %7 : vector<8x128xf32>
    %9 = vector.extract_strided_slice %5 {offsets = [0, 128], sizes = [8, 128], strides = [1, 1]} : vector<8x384xf32> to vector<8x128xf32>
    %10 = vector.extract_strided_slice %5 {offsets = [0, 256], sizes = [8, 128], strides = [1, 1]} : vector<8x384xf32> to vector<8x128xf32>
    %11 = arith.subf %9, %10 : vector<8x128xf32>
    %12 = arith.negf %11 : vector<8x128xf32>
    %13 = math.exp %12 : vector<8x128xf32>
    %cst_6 = arith.constant 1.000000e+00 : f32
    %14 = vector.broadcast %cst_6 : f32 to vector<8x128xf32>
    %15 = arith.addf %14, %13 : vector<8x128xf32>
    %16 = arith.divf %14, %15 : vector<8x128xf32>
    %c0_7 = arith.constant 0 : index
    %c0_8 = arith.constant 0 : index
    %17 = vector.load %arg4[%c0_7, %c0_8] : memref<128x128xf32, #tpu.memory_space<vmem>>, vector<128x128xf32>
    %cst_9 = arith.constant dense<0.000000e+00> : vector<8x128xf32>
    %18 = tpu.matmul %8, %17, %cst_9 {dimension_numbers = #tpu.dot_dimension_numbers<[1], [0], [0], [1], [0, 0, 1, 1], [], []>} : vector<8x128xf32>, vector<128x128xf32>, vector<8x128xf32> -> vector<8x128xf32>
    %c0_10 = arith.constant 0 : index
    %c0_11 = arith.constant 0 : index
    %19 = vector.load %arg5[%c0_10, %c0_11] : memref<1x128xf32, #tpu.memory_space<vmem>>, vector<1x128xf32>
    %20 = vector.broadcast %19 : vector<1x128xf32> to vector<8x128xf32>
    %21 = arith.addf %18, %20 : vector<8x128xf32>
    %c0_12 = arith.constant 0 : index
    %c0_13 = arith.constant 0 : index
    %22 = vector.load %arg6[%c0_12, %c0_13] : memref<8x256xf32, #tpu.memory_space<vmem>>, vector<8x128xf32>
    tpu.vector_store %arg6[%c0_12, %c0_13], %21 {strides = array<i32>} : memref<8x256xf32, #tpu.memory_space<vmem>>, vector<8x128xf32>,
    %c0_14 = arith.constant 0 : index
    %c128 = arith.constant 128 : index
    %23 = vector.load %arg6[%c0_14, %c128] : memref<8x256xf32, #tpu.memory_space<vmem>>, vector<8x128xf32>
    tpu.vector_store %arg6[%c0_14, %c128], %16 {strides = array<i32>} : memref<8x256xf32, #tpu.memory_space<vmem>>, vector<8x128xf32>,
    return
  }
  func.func @transform_0(%arg0: i32) -> (i32, i32) {
    %c0_i32 = arith.constant 0 : i32
    %c0_i32_0 = arith.constant 0 : i32
    return %arg0, %c0_i32 : i32, i32
  }
  func.func @transform_1(%arg0: i32) -> (i32, i32) {
    %c0_i32 = arith.constant 0 : i32
    %c0_i32_0 = arith.constant 0 : i32
    %c0_i32_1 = arith.constant 0 : i32
    return %c0_i32, %c0_i32_0 : i32, i32
  }
  func.func @transform_2(%arg0: i32) -> (i32, i32) {
    %c0_i32 = arith.constant 0 : i32
    %c0_i32_0 = arith.constant 0 : i32
    %c0_i32_1 = arith.constant 0 : i32
    return %c0_i32, %c0_i32_0 : i32, i32
  }
  func.func @transform_3(%arg0: i32) -> (i32, i32) {
    %c0_i32 = arith.constant 0 : i32
    %c0_i32_0 = arith.constant 0 : i32
    %c0_i32_1 = arith.constant 0 : i32
    return %c0_i32, %c0_i32_0 : i32, i32
  }
  func.func @transform_4(%arg0: i32) -> (i32, i32) {
    %c0_i32 = arith.constant 0 : i32
    %c0_i32_0 = arith.constant 0 : i32
    %c0_i32_1 = arith.constant 0 : i32
    return %c0_i32, %c0_i32_0 : i32, i32
  }
  func.func @transform_5(%arg0: i32) -> (i32, i32) {
    %c0_i32 = arith.constant 0 : i32
    %c0_i32_0 = arith.constant 0 : i32
    return %arg0, %c0_i32 : i32, i32
  }
}

</mosaic_0001>

<llo_original>
// kernel: tpu_custom_call.1
$region0: #{tpu_custom_call.1}
  #allocation0 [shape = 'u32[]', space=smem, size = 0x4, offset = 0x4, fixed_abs, tag = 'smem constant byte address 0x4 - core index']
  #allocation1 [shape = 'u32[144,128]{1,0:T(1,128)}', space=vmem, size = 0x12000, scoped, tag = 'internal scratch']
  %s0 = inlined_call_operand.hbm [shape: f32[8,32], index: 0, kind: input, shape index: {}]
  %s1 = inlined_call_operand.hbm [shape: f32[32,384], index: 1, kind: input, shape index: {}]
  %s2 = inlined_call_operand.vmem [shape: f32[1,384], index: 2, kind: input, shape index: {}]
  %s3 = inlined_call_operand.hbm [shape: f32[128,128], index: 3, kind: input, shape index: {}]
  %s4 = inlined_call_operand.vmem [shape: f32[1,128], index: 4, kind: input, shape index: {}]
  %s5 = inlined_call_operand.hbm [shape: f32[8,256], index: 5, kind: output, shape index: {}]
  %s6 = sld [smem:[#allocation0]]
  $region42: #{tpu_custom_call.1} parent=0
    _
  %s8 = ssub.s32 1, %s6
  %s9 = scalar_select 0, %s8, %s6
  $region1: #{tpu_custom_call.1} parent=0
    #allocation2 [shape = 'u8[4096]{0}', space=vmem, size = 0x1000, scoped, tag = 'input window, operand 0, single buffered']
    #allocation3 [shape = 's32[1]{0}', space=sflag, size = 0x4, scoped, tag = 'scoped memory for tpu_custom_call.1']
    #allocation4 [shape = 's32[1]{0}', space=sflag, size = 0x4, scoped, tag = 'scoped memory for tpu_custom_call.1']
    #allocation5 [shape = 'u8[49152]{0}', space=vmem, size = 0xc000, scoped, tag = 'input window, operand 1, single buffered']
    #allocation6 [shape = 's32[1]{0}', space=sflag, size = 0x4, scoped, tag = 'scoped memory for tpu_custom_call.1']
    #allocation7 [shape = 'u8[65536]{0}', space=vmem, size = 0x10000, scoped, tag = 'input window, operand 3, single buffered']
    #allocation8 [shape = 'u8[8192]{0}', space=vmem, size = 0x2000, scoped, tag = 'output window, operand 0, single buffered']
    %10 = vsyncpa [#allocation3], 0
    %11 = vsyncpa [#allocation6], 0
    %12 = vsyncpa [#allocation4], 0
    // Predicated region
    $region2: #{tpu_custom_call.1} parent=1 // pred_check
      _
    $region3: #{tpu_custom_call.1} parent=1 // pred_check_branch
      %14 = sbr.rel (0) target = $region5
    $region4: #{tpu_custom_call.1} parent=1 // pred_region
      %s16 = ssub.s32 128, 128
      %17 = vsyncadd [#allocation3], %s16
      %s19 = sshll.u32 [#allocation2], 4
      %s20 = int_to_ptr.vmem [resolvable:$true] %s19
      %22 = dma.hbm_to_vmem [thread:$0]  %s0, 128, %s20, [#allocation3]
    $region5: #{tpu_custom_call.1} parent=1 // pred_fallthru
      _
    // Predicated region
    $region6: #{tpu_custom_call.1} parent=1 // pred_check
      _
    $region7: #{tpu_custom_call.1} parent=1 // pred_check_branch
      %24 = sbr.rel (0) target = $region9
    $region8: #{tpu_custom_call.1} parent=1 // pred_region
      %s26 = ssub.s32 1536, 1536
      %27 = vsyncadd [#allocation6], %s26
      %s28 = sshll.u32 [#allocation5], 4
      %s29 = int_to_ptr.vmem [resolvable:$true] %s28
      %34 = dma.hbm_to_vmem [thread:$0]  %s1, 1536, %s29, [#allocation6], 384, 384, 24
    $region9: #{tpu_custom_call.1} parent=1 // pred_fallthru
      _
    // Predicated region
    $region10: #{tpu_custom_call.1} parent=1 // pred_check
      _
    $region11: #{tpu_custom_call.1} parent=1 // pred_check_branch
      %36 = sbr.rel (0) target = $region13
    $region12: #{tpu_custom_call.1} parent=1 // pred_region
      _
    $region13: #{tpu_custom_call.1} parent=1 // pred_fallthru
      _
    // Predicated region
    $region14: #{tpu_custom_call.1} parent=1 // pred_check
      _
    $region15: #{tpu_custom_call.1} parent=1 // pred_check_branch
      %38 = sbr.rel (0) target = $region17
    $region16: #{tpu_custom_call.1} parent=1 // pred_region
      %s40 = ssub.s32 2048, 2048
      %41 = vsyncadd [#allocation6], %s40
      %s42 = sshll.u32 [#allocation7], 4
      %s43 = int_to_ptr.vmem [resolvable:$true] %s42
      %48 = dma.hbm_to_vmem [thread:$0]  %s3, 2048, %s43, [#allocation6], 128, 128, 8
    $region17: #{tpu_custom_call.1} parent=1 // pred_fallthru
      _
    // Predicated region
    $region18: #{tpu_custom_call.1} parent=1 // pred_check
      _
    $region19: #{tpu_custom_call.1} parent=1 // pred_check_branch
      %50 = sbr.rel (0) target = $region21
    $region20: #{tpu_custom_call.1} parent=1 // pred_region
      _
    $region21: #{tpu_custom_call.1} parent=1 // pred_fallthru
      _
    // Predicated region
    $region22: #{tpu_custom_call.1} parent=1 // pred_check
      _
    $region23: #{tpu_custom_call.1} parent=1 // pred_check_branch
      %52 = sbr.rel (0) target = $region25
    $region24: #{tpu_custom_call.1} parent=1 // pred_region
      %53 = dma.done [#allocation3], 128
    $region25: #{tpu_custom_call.1} parent=1 // pred_fallthru
      _
    // Predicated region
    $region26: #{tpu_custom_call.1} parent=1 // pred_check
      _
    $region27: #{tpu_custom_call.1} parent=1 // pred_check_branch
      %55 = sbr.rel (0) target = $region29
    $region28: #{tpu_custom_call.1} parent=1 // pred_region
      %56 = dma.done [#allocation6], 1536
    $region29: #{tpu_custom_call.1} parent=1 // pred_fallthru
      _
    // Predicated region
    $region30: #{tpu_custom_call.1} parent=1 // pred_check
      _
    $region31: #{tpu_custom_call.1} parent=1 // pred_check_branch
      %58 = sbr.rel (0) target = $region33
    $region32: #{tpu_custom_call.1} parent=1 // pred_region
      %59 = dma.done [#allocation6], 2048
    $region33: #{tpu_custom_call.1} parent=1 // pred_fallthru
      _
    %v60 = vld [vmem:[#allocation2] sm:$0xff]
    %v61 = vld [vmem:[#allocation5] sm:$0xff]
    %v62 = vld [vmem:[#allocation5 + $0x8] sm:$0xff]
    %v63 = vld [vmem:[#allocation5 + $0x10] sm:$0xff]
    %v64 = vld [vmem:[#allocation5 + $0x18] sm:$0xff]
    %v65 = vld [vmem:[#allocation5 + $0x20] sm:$0xff]
    %v66 = vld [vmem:[#allocation5 + $0x28] sm:$0xff]
    %v67 = vld [vmem:[#allocation5 + $0x30] sm:$0xff]
    %v68 = vld [vmem:[#allocation5 + $0x38] sm:$0xff]
    %v69 = vld [vmem:[#allocation5 + $0x40] sm:$0xff]
    %v70 = vld [vmem:[#allocation5 + $0x48] sm:$0xff]
    %v71 = vld [vmem:[#allocation5 + $0x50] sm:$0xff]
    %v72 = vld [vmem:[#allocation5 + $0x58] sm:$0xff]
    %v73 = vld [vmem:[%s2] sm:$0x7]
    %v75 = vlaneseq
    %v76 = vshrl.u32 %v75, 7
    %v77 = vsub.s32 0, %v76
    %v78 = vrot.slane %v73, %v77
    %v79 = vlaneseq
    %v80 = vshrl.u32 %v79, 7
    %v81 = vsub.s32 1, %v80
    %v82 = vrot.slane %v73, %v81
    %v83 = vlaneseq
    %v84 = vshrl.u32 %v83, 7
    %v85 = vsub.s32 2, %v84
    %v86 = vrot.slane %v73, %v85
    %vm90 = vcmask 261120
    %v92 = vsel %vm90, %v60, 0
    %94 = vmatprep.subr.mxu0 %v62
    %95 = vmatpush1.msra.mxu0 %v61
    %96 = vmatprep.subr.mxu0 %v65
    %97 = vmatpush1.msra.mxu0 %v64
    %98 = vmatprep.subr.mxu0 %v68
    %99 = vmatpush1.msra.mxu0 %v67
    %100 = vmatprep.subr.mxu0 %v71
    %101 = vmatpush1.msra.mxu0 %v70
    %102 = vmatprep.subr.mxu0 0.0
    %103 = vmatpush1.msra.mxu0 0.0
    %104 = vmatprep.subr.mxu0 0.0
    %105 = vmatpush1.msra.mxu0 0.0
    %106 = vmatprep.subr.mxu0 0.0
    %107 = vmatpush1.msra.mxu0 0.0
    %108 = vmatprep.subr.mxu0 0.0
    %109 = vmatpush1.msra.mxu0 0.0
    %110 = vmatprep.subr.mxu0 0.0
    %111 = vmatpush1.msra.mxu0 0.0
    %112 = vmatprep.subr.mxu0 0.0
    %113 = vmatpush1.msra.mxu0 0.0
    %114 = vmatprep.subr.mxu0 0.0
    %115 = vmatpush1.msra.mxu0 0.0
    %116 = vmatprep.subr.mxu0 0.0
    %117 = vmatpush1.msra.mxu0 0.0
    %118 = vmatprep.subr.mxu0 0.0
    %119 = vmatpush1.msra.mxu0 0.0
    %120 = vmatprep.subr.mxu0 0.0
    %121 = vmatpush1.msra.mxu0 0.0
    %122 = vmatprep.subr.mxu0 0.0
    %123 = vmatpush1.msra.mxu0 0.0
    %124 = vmatprep.subr.mxu0 0.0
    %125 = vmatpush1.msra.mxu0 0.0
    %126 = vmatprep.subr.mxu0 0.0
    %127 = vmatpush1.msra.mxu0 0.0
    %128 = vmatprep.subr.mxu0 0.0
    %129 = vmatpush1.msra.mxu0 0.0
    %130 = vmatprep.subr.mxu0 0.0
    %131 = vmatpush1.msra.mxu0 0.0
    %132 = vmatprep.subr.mxu0 0.0
    %133 = vmatpush1.msra.mxu0 0.0
    %134 = vmatprep.subr.mxu0 0.0
    %135 = vmatpush1.msra.mxu0 0.0
    %136 = vmatprep.subr.mxu0 0.0
    %137 = vmatpush1.msra.mxu0 0.0
    %138 = vmatprep.subr.mxu0 0.0
    %139 = vmatpush1.msra.mxu0 0.0
    %140 = vmatprep.subr.mxu0 0.0
    %141 = vmatpush1.msra.mxu0 0.0
    %142 = vmatprep.subr.mxu0 0.0
    %143 = vmatpush1.msra.mxu0 0.0
    %144 = vmatprep.subr.mxu0 0.0
    %145 = vmatpush1.msra.mxu0 0.0
    %146 = vmatprep.subr.mxu0 0.0
    %147 = vmatpush1.msra.mxu0 0.0
    %148 = vmatprep.subr.mxu0 0.0
    %149 = vmatpush1.msra.mxu0 0.0
    %150 = vmatprep.subr.mxu0 0.0
    %151 = vmatpush1.msra.mxu0 0.0
    %152 = vmatprep.subr.mxu0 0.0
    %153 = vmatpush1.msra.mxu0 0.0
    %154 = vmatprep.subr.mxu0 0.0
    %155 = vmatpush1.msra.mxu0 0.0
    %156 = vmatprep.subr.mxu0 0.0
    %157 = vmatpush1.msra.mxu0 0.0
    %158 = vmatprep.mubr.f32.mxu0 0.0
    %159 = vmatmul.mubr.f32.gmra.mrb[0].mxu0 %v92
    %v160 = vpop.f32.mrb[0].mxu0
    %v161 = vadd.f32 %v78, %v160
    %v162 = vpop.f32.mrb[0].mxu0
    %v163 = vadd.f32 %v82, %v162
    %164 = vdwg.mxu0
    %165 = vmatprep.subr.mxu0 0.0
    %166 = vmatpush1.msra.mxu0 %v63
    %167 = vmatprep.subr.mxu0 0.0
    %168 = vmatpush1.msra.mxu0 %v66
    %169 = vmatprep.subr.mxu0 0.0
    %170 = vmatpush1.msra.mxu0 %v69
    %171 = vmatprep.subr.mxu0 0.0
    %172 = vmatpush1.msra.mxu0 %v72
    %173 = vmatprep.subr.mxu0 0.0
    %174 = vmatpush1.msra.mxu0 0.0
    %175 = vmatprep.subr.mxu0 0.0
    %176 = vmatpush1.msra.mxu0 0.0
    %177 = vmatprep.subr.mxu0 0.0
    %178 = vmatpush1.msra.mxu0 0.0
    %179 = vmatprep.subr.mxu0 0.0
    %180 = vmatpush1.msra.mxu0 0.0
    %181 = vmatprep.subr.mxu0 0.0
    %182 = vmatpush1.msra.mxu0 0.0
    %183 = vmatprep.subr.mxu0 0.0
    %184 = vmatpush1.msra.mxu0 0.0
    %185 = vmatprep.subr.mxu0 0.0
    %186 = vmatpush1.msra.mxu0 0.0
    %187 = vmatprep.subr.mxu0 0.0
    %188 = vmatpush1.msra.mxu0 0.0
    %189 = vmatprep.subr.mxu0 0.0
    %190 = vmatpush1.msra.mxu0 0.0
    %191 = vmatprep.subr.mxu0 0.0
    %192 = vmatpush1.msra.mxu0 0.0
    %193 = vmatprep.subr.mxu0 0.0
    %194 = vmatpush1.msra.mxu0 0.0
    %195 = vmatprep.subr.mxu0 0.0
    %196 = vmatpush1.msra.mxu0 0.0
    %197 = vmatprep.subr.mxu0 0.0
    %198 = vmatpush1.msra.mxu0 0.0
    %199 = vmatprep.subr.mxu0 0.0
    %200 = vmatpush1.msra.mxu0 0.0
    %201 = vmatprep.subr.mxu0 0.0
    %202 = vmatpush1.msra.mxu0 0.0
    %203 = vmatprep.subr.mxu0 0.0
    %204 = vmatpush1.msra.mxu0 0.0
    %205 = vmatprep.subr.mxu0 0.0
    %206 = vmatpush1.msra.mxu0 0.0
    %207 = vmatprep.subr.mxu0 0.0
    %208 = vmatpush1.msra.mxu0 0.0
    %209 = vmatprep.subr.mxu0 0.0
    %210 = vmatpush1.msra.mxu0 0.0
    %211 = vmatprep.subr.mxu0 0.0
    %212 = vmatpush1.msra.mxu0 0.0
    %213 = vmatprep.subr.mxu0 0.0
    %214 = vmatpush1.msra.mxu0 0.0
    %215 = vmatprep.subr.mxu0 0.0
    %216 = vmatpush1.msra.mxu0 0.0
    %217 = vmatprep.subr.mxu0 0.0
    %218 = vmatpush1.msra.mxu0 0.0
    %219 = vmatprep.subr.mxu0 0.0
    %220 = vmatpush1.msra.mxu0 0.0
    %221 = vmatprep.subr.mxu0 0.0
    %222 = vmatpush1.msra.mxu0 0.0
    %223 = vmatprep.subr.mxu0 0.0
    %224 = vmatpush1.msra.mxu0 0.0
    %225 = vmatprep.subr.mxu0 0.0
    %226 = vmatpush1.msra.mxu0 0.0
    %227 = vmatprep.subr.mxu0 0.0
    %228 = vmatpush1.msra.mxu0 0.0
    %229 = vmatprep.mubr.f32.mxu0 0.0
    %230 = vmatmul.mubr.f32.gmra.mrb[0].mxu0 %v92
    %v231 = vpop.f32.mrb[0].mxu0
    %v232 = vadd.f32 %v86, %v231
    %v233 = vpop.f32.mrb[0].mxu0
    %234 = vdwg.mxu0
    %v235 = vmax.f32 %v161, 0.0
    %v236 = vsub.f32 %v163, %v232
    %v237 = vxor.u32 %v236, 2147483648
    %v238 = vmul.f32 %v237, 1.442695
    %v239 = vpow.pop %v238
    %v240 = vadd.f32 %v239, 1.0
    %v241 = vrcp.pop %v240
    %v242 = vmul.f32 1.0, %v241
    %v243 = vld [vmem:[#allocation7] sm:$0xff]
    %v244 = vld [vmem:[#allocation7 + $0x8] sm:$0xff]
    %v245 = vld [vmem:[#allocation7 + $0x10] sm:$0xff]
    %v246 = vld [vmem:[#allocation7 + $0x18] sm:$0xff]
    %v247 = vld [vmem:[#allocation7 + $0x20] sm:$0xff]
    %v248 = vld [vmem:[#allocation7 + $0x28] sm:$0xff]
    %v249 = vld [vmem:[#allocation7 + $0x30] sm:$0xff]
    %v250 = vld [vmem:[#allocation7 + $0x38] sm:$0xff]
    %v251 = vld [vmem:[#allocation7 + $0x40] sm:$0xff]
    %v252 = vld [vmem:[#allocation7 + $0x48] sm:$0xff]
    %v253 = vld [vmem:[#allocation7 + $0x50] sm:$0xff]
    %v254 = vld [vmem:[#allocation7 + $0x58] sm:$0xff]
    %v255 = vld [vmem:[#allocation7 + $0x60] sm:$0xff]
    %v256 = vld [vmem:[#allocation7 + $0x68] sm:$0xff]
    %v257 = vld [vmem:[#allocation7 + $0x70] sm:$0xff]
    %v258 = vld [vmem:[#allocation7 + $0x78] sm:$0xff]
    %v259 = vld [vmem:[%s4] sm:$0x1]
    %v261 = vlaneseq
    %v262 = vshrl.u32 %v261, 7
    %v263 = vsub.s32 0, %v262
    %v264 = vrot.slane %v259, %v263
    %266 = vmatprep.subr.mxu0 0.0
    %267 = vmatpush1.msra.mxu0 %v243
    %268 = vmatprep.subr.mxu0 0.0
    %269 = vmatpush1.msra.mxu0 %v244
    %270 = vmatprep.subr.mxu0 0.0
    %271 = vmatpush1.msra.mxu0 %v245
    %272 = vmatprep.subr.mxu0 0.0
    %273 = vmatpush1.msra.mxu0 %v246
    %274 = vmatprep.subr.mxu0 0.0
    %275 = vmatpush1.msra.mxu0 %v247
    %276 = vmatprep.subr.mxu0 0.0
    %277 = vmatpush1.msra.mxu0 %v248
    %278 = vmatprep.subr.mxu0 0.0
    %279 = vmatpush1.msra.mxu0 %v249
    %280 = vmatprep.subr.mxu0 0.0
    %281 = vmatpush1.msra.mxu0 %v250
    %282 = vmatprep.subr.mxu0 0.0
    %283 = vmatpush1.msra.mxu0 %v251
    %284 = vmatprep.subr.mxu0 0.0
    %285 = vmatpush1.msra.mxu0 %v252
    %286 = vmatprep.subr.mxu0 0.0
    %287 = vmatpush1.msra.mxu0 %v253
    %288 = vmatprep.subr.mxu0 0.0
    %289 = vmatpush1.msra.mxu0 %v254
    %290 = vmatprep.subr.mxu0 0.0
    %291 = vmatpush1.msra.mxu0 %v255
    %292 = vmatprep.subr.mxu0 0.0
    %293 = vmatpush1.msra.mxu0 %v256
    %294 = vmatprep.subr.mxu0 0.0
    %295 = vmatpush1.msra.mxu0 %v257
    %296 = vmatprep.subr.mxu0 0.0
    %297 = vmatpush1.msra.mxu0 %v258
    %298 = vmatprep.subr.mxu0 0.0
    %299 = vmatpush1.msra.mxu0 0.0
    %300 = vmatprep.subr.mxu0 0.0
    %301 = vmatpush1.msra.mxu0 0.0
    %302 = vmatprep.subr.mxu0 0.0
    %303 = vmatpush1.msra.mxu0 0.0
    %304 = vmatprep.subr.mxu0 0.0
    %305 = vmatpush1.msra.mxu0 0.0
    %306 = vmatprep.subr.mxu0 0.0
    %307 = vmatpush1.msra.mxu0 0.0
    %308 = vmatprep.subr.mxu0 0.0
    %309 = vmatpush1.msra.mxu0 0.0
    %310 = vmatprep.subr.mxu0 0.0
    %311 = vmatpush1.msra.mxu0 0.0
    %312 = vmatprep.subr.mxu0 0.0
    %313 = vmatpush1.msra.mxu0 0.0
    %314 = vmatprep.subr.mxu0 0.0
    %315 = vmatpush1.msra.mxu0 0.0
    %316 = vmatprep.subr.mxu0 0.0
    %317 = vmatpush1.msra.mxu0 0.0
    %318 = vmatprep.subr.mxu0 0.0
    %319 = vmatpush1.msra.mxu0 0.0
    %320 = vmatprep.subr.mxu0 0.0
    %321 = vmatpush1.msra.mxu0 0.0
    %322 = vmatprep.subr.mxu0 0.0
    %323 = vmatpush1.msra.mxu0 0.0
    %324 = vmatprep.subr.mxu0 0.0
    %325 = vmatpush1.msra.mxu0 0.0
    %326 = vmatprep.subr.mxu0 0.0
    %327 = vmatpush1.msra.mxu0 0.0
    %328 = vmatprep.subr.mxu0 0.0
    %329 = vmatpush1.msra.mxu0 0.0
    %330 = vmatprep.mubr.f32.mxu0 0.0
    %331 = vmatmul.mubr.f32.gmra.mrb[0].mxu0 %v235
    %v332 = vpop.f32.mrb[0].mxu0
    %v333 = vadd.f32 %v264, %v332
    %v334 = vpop.f32.mrb[0].mxu0
    %335 = vdwg.mxu0
    %336 = vst [vmem:[#allocation8] sm:$0xff] %v333
    %337 = vst [vmem:[#allocation8 + $0x8] sm:$0xff] %v242
    // Predicated region
    $region34: #{tpu_custom_call.1} parent=1 // pred_check
      _
    $region35: #{tpu_custom_call.1} parent=1 // pred_check_branch
      %339 = sbr.rel (0) target = $region37
    $region36: #{tpu_custom_call.1} parent=1 // pred_region
      %s341 = ssub.s32 256, 256
      %342 = vsyncadd [#allocation4], %s341
      %s344 = sshll.u32 [#allocation8], 4
      %s345 = int_to_ptr.vmem [resolvable:$true] %s344
      %347 = dma.vmem_to_hbm [thread:$0]  %s345, 256, %s5, [#allocation4]
    $region37: #{tpu_custom_call.1} parent=1 // pred_fallthru
      _
    // Predicated region
    $region38: #{tpu_custom_call.1} parent=1 // pred_check
      _
    $region39: #{tpu_custom_call.1} parent=1 // pred_check_branch
      %349 = sbr.rel (0) target = $region41
    $region40: #{tpu_custom_call.1} parent=1 // pred_region
      %350 = dma.done [#allocation4], 256
    $region41: #{tpu_custom_call.1} parent=1 // pred_fallthru
      _
    %351 = vsyncpa [#allocation3], 1
    %352 = vsyncpa [#allocation6], 1
    %353 = vsyncpa [#allocation4], 1

</llo_original>
